<compile_context>
chip_gen: v7x
topology: tpu7x:2x2x1
jax: 0.10.0
libtpu: 0.0.40
codegen_flags: <defaults>
</compile_context>

<pallas_src>
import jax
import jax.numpy as jnp
from jax import lax
from jax.experimental import pallas as pl
from jax.experimental.pallas import tpu as pltpu

LANES = 128
ROW_PAD = 16            # pad rows to a multiple of 16 (bf16-safe sublane tile)
MAX_BLOCK_ROWS = 512    # 512*128*4B = 256 KiB per f32 input block per grid step
NCORES = 2              # leading "parallel" grid axis (v7x megacore); safe on 1-TC chips


def _ceil_div(a, b):
    return -(-a // b)


def _tiled_rows(n_elements):
    return _ceil_div(max(int(n_elements), 1), ROW_PAD * LANES) * ROW_PAD


def _prep(x):
    """(any shape / float dtype) -> (rows, 128) lane-major stream.

    Only the ragged tail is zero-padded; the dtype is preserved (the kernel
    casts to f32), so no full padded-f32 copy is materialized in HBM.
    """
    flat = jnp.ravel(x)
    n = flat.shape[0]
    pad = (-n) % (ROW_PAD * LANES)
    if n == 0:
        pad = ROW_PAD * LANES
    if pad:
        flat = jnp.pad(flat, (0, pad))
    return flat.reshape(-1, LANES)


# ---------------------------------------------------------------------------
# Per-element loss terms (evaluated on f32 tiles inside the kernel).
# Zero-padded tail elements contribute exactly 0 to every term.
# ---------------------------------------------------------------------------
def _l1_term(a, gt):
    return jnp.abs(a - gt)


def _sum_term(x):
    return x


def _bce_two_log_term(x, y):
    # torch.nn.BCELoss on clamp(x, 0, 1); log clamped at -100 like PyTorch.
    xc = jnp.clip(x, 0.0, 1.0)
    log_x = jnp.maximum(jnp.log(xc), -100.0)
    log_1mx = jnp.maximum(jnp.log(1.0 - xc), -100.0)
    return -(y * log_x + (1.0 - y) * log_1mx)


def _bce_binary_term(x, y):
    # Single-log fast path (1 EUP transcendental/elem instead of 2);
    # mathematically identical to the two-log form for binary y in {0,1}.
    xc = jnp.clip(x, 0.0, 1.0)
    p = jnp.where(y > 0.5, xc, 1.0 - xc)
    return -jnp.maximum(jnp.log(p), -100.0)


# ---------------------------------------------------------------------------
# Generic fused multi-term sum-reduction: ONE pallas_call, many scalar sums.
# ---------------------------------------------------------------------------
def _fused_reduce(terms, tiles):
    """terms: list of (fn, input_indices); tiles: list of (rows,128) streams
    (all with the same row count). Returns a tuple of f32 scalars, the t-th
    being sum over all elements of fn_t(*selected f32 tiles)."""
    rows = tiles[0].shape[0]
    for t in tiles:
        assert t.shape == (rows, LANES), (t.shape, rows)
    nterms = len(terms)
    n_in = len(tiles)

    bm = min(MAX_BLOCK_ROWS, rows)          # large block: amortize per-step overhead
    nblocks = _ceil_div(rows, bm)
    ncores = min(NCORES, nblocks)
    inner = _ceil_div(nblocks, ncores)
    # OOB rows exist iff the last block is partial or a core gets a clamped
    # (duplicate) block; zero-padded tail rows need no masking (terms are 0).
    need_clamp = (ncores * inner != nblocks)
    need_mask = need_clamp or (rows % bm != 0)

    def in_index_map(c, j):
        b = c * inner + j
        if need_clamp:
            b = jnp.minimum(b, nblocks - 1)   # duplicate block is fully masked
        return (b, 0)

    out_index_map = lambda c, j: (c, 0)       # resident accumulator per core

    def kernel(*refs):
        in_refs = refs[:n_in]
        out_refs = refs[n_in:]
        c = pl.program_id(0)
        j = pl.program_id(1)

        @pl.when(j == 0)
        def _init():
            for o in out_refs:
                o[...] = jnp.zeros_like(o)

        vals = [r[...].astype(jnp.float32) for r in in_refs]
        if need_mask:
            row = lax.broadcasted_iota(jnp.int32, (bm, LANES), 0)
            valid = (c * inner + j) * bm + row < rows
        for t, (fn, idxs) in enumerate(terms):
            contrib = fn(*[vals[i] for i in idxs])
            if need_mask:
                contrib = jnp.where(valid, contrib, 0.0)
            out_refs[t][...] += contrib       # pure VPU elementwise accumulate

    outs = pl.pallas_call(
        kernel,
        out_shape=tuple(
            jax.ShapeDtypeStruct((ncores * bm, LANES), jnp.float32)
            for _ in range(nterms)),
        grid=(ncores, inner),
        in_specs=[pl.BlockSpec((bm, LANES), in_index_map) for _ in tiles],
        out_specs=tuple(pl.BlockSpec((bm, LANES), out_index_map)
                        for _ in range(nterms)),
        compiler_params=pltpu.CompilerParams(
            dimension_semantics=("parallel", "arbitrary")),
    )(*tiles)
    if not isinstance(outs, (tuple, list)):
        outs = (outs,)
    # Final cross-lane reduce of the small per-core partial slab (tiny XLA op).
    return tuple(jnp.sum(o) for o in outs)


# ---------------------------------------------------------------------------
# Loss module equivalent (forward pass)
# ---------------------------------------------------------------------------
class Loss:
    def __init__(self, full_weight, grad_weight, mask_weight=1.0, cfg=None,
                 binary_mask_gt=False):
        self.full_weight = float(full_weight)
        self.grad_weight = float(grad_weight)
        self.mask_weight = float(mask_weight)
        # If BCE targets are known binary, use the single-log fast path
        # (halves EUP work); default keeps the general soft-target formula.
        self.binary_mask_gt = bool(binary_mask_gt)

    def _bce_term(self):
        return _bce_binary_term if self.binary_mask_gt else _bce_two_log_term

    # --- standalone pieces (same API as the PyTorch module) ----------------
    def get_rgb_full_loss(self, rgb_values, rgb_gt):
        (s,) = _fused_reduce([(_l1_term, (0, 1))],
                             [_prep(rgb_values), _prep(rgb_gt)])
        return s / float(rgb_values.shape[1])

    def get_smooth_loss(self, diff_norm):
        if diff_norm is None or diff_norm.shape[0] == 0 or diff_norm.size == 0:
            return jnp.float32(0.0)
        (s,) = _fused_reduce([(_sum_term, (0,))], [_prep(diff_norm)])
        return s / float(diff_norm.size)

    def get_mask_loss(self, mask, mask_gt):
        (s,) = _fused_reduce([(self._bce_term(), (0, 1))],
                             [_prep(mask), _prep(mask_gt)])
        return s / float(mask.size)

    # --- forward ------------------------------------------------------------
    def __call__(self, out_dict, rgb_gt, mask=None, mask_gt=None):
        rgb_pred = out_dict['rgb']
        diff_norm = out_dict['diff_norm']
        rgb_fine = out_dict.get('rgb_fine', None)
        zero = jnp.float32(0.0)

        # RGB L1 losses: fused coarse+fine pass -> rgb_gt is streamed from HBM
        # exactly once and only one kernel launch is paid.
        rgb_full_loss = zero
        rgb_fine_loss = None
        if (rgb_fine is not None and self.full_weight != 0.0
                and rgb_fine.shape == rgb_pred.shape):
            s_main, s_fine = _fused_reduce(
                [(_l1_term, (0, 2)), (_l1_term, (1, 2))],
                [_prep(rgb_pred), _prep(rgb_fine), _prep(rgb_gt)])
            rgb_full_loss = s_main / float(rgb_pred.shape[1])
            rgb_fine_loss = s_fine / float(rgb_fine.shape[1])
        else:
            if self.full_weight != 0.0:
                rgb_full_loss = self.get_rgb_full_loss(rgb_pred, rgb_gt)
            if rgb_fine is not None:
                rgb_fine_loss = self.get_rgb_full_loss(rgb_fine, rgb_gt)

        # Smoothness mean + mask BCE: fused into one pass when both streams
        # tile to the same number of rows (the common per-ray case).
        want_grad = (diff_norm is not None and self.grad_weight != 0.0
                     and diff_norm.shape[0] != 0 and diff_norm.size != 0)
        want_bce = (mask is not None and mask_gt is not None)
        grad_loss = zero
        lmask = None
        if (want_grad and want_bce
                and _tiled_rows(diff_norm.size) == _tiled_rows(mask.size)
                and _tiled_rows(mask.size) == _tiled_rows(mask_gt.size)):
            s_d, s_b = _fused_reduce(
                [(_sum_term, (0,)), (self._bce_term(), (1, 2))],
                [_prep(diff_norm), _prep(mask), _prep(mask_gt)])
            grad_loss = s_d / float(diff_norm.size)
            lmask = s_b / float(mask.size)
        else:
            if diff_norm is not None and self.grad_weight != 0.0:
                grad_loss = self.get_smooth_loss(diff_norm)
            if want_bce:
                lmask = self.get_mask_loss(mask, mask_gt)

        loss = self.full_weight * rgb_full_loss + self.grad_weight * grad_loss
        loss_term = {'rgb_loss': rgb_full_loss, 'grad_loss': grad_loss}
        if rgb_fine_loss is not None:
            loss = loss + self.full_weight * rgb_fine_loss
            loss_term['rgb_fine_loss'] = rgb_fine_loss
        if lmask is not None:
            loss = loss + self.mask_weight * lmask
            loss_term['mask_loss'] = lmask
        loss_term['loss'] = loss
        # TODO(synk): torch.isnan(loss) -> breakpoint() debugging hook omitted
        return loss_term


# ---------------------------------------------------------------------------
def _ref_terms(rgb_pred, rgb_gt, diff_norm, mask, mask_gt, rgb_fine=None):
    ref = {}
    ref['rgb'] = jnp.sum(jnp.abs(rgb_pred - rgb_gt)) / float(rgb_pred.shape[1])
    if rgb_fine is not None:
        ref['fine'] = jnp.sum(jnp.abs(rgb_fine - rgb_gt)) / float(rgb_fine.shape[1])
    ref['grad'] = jnp.mean(diff_norm)
    mc = jnp.clip(mask, 0.0, 1.0)
    ref['bce'] = jnp.mean(-(mask_gt * jnp.maximum(jnp.log(mc), -100.0)
                            + (1.0 - mask_gt) * jnp.maximum(jnp.log(1.0 - mc), -100.0)))
    return ref


if __name__ == "__main__":
    key = jax.random.PRNGKey(0)
    k1, k2, k3, k4, k5, k6, k7, k8, k9, k10, k11 = jax.random.split(key, 11)

    # ---- small case (single block, fused coarse+fine, binary-target BCE) ----
    N, C = 256, 3
    rgb_pred = jax.random.uniform(k1, (N, C), jnp.float32)
    rgb_gt = jax.random.uniform(k2, (N, C), jnp.float32)
    rgb_fine = jax.random.uniform(k3, (N, C), jnp.float32)
    diff_norm = jnp.abs(jax.random.normal(k4, (N, 1), jnp.float32))
    mask = jax.nn.sigmoid(jax.random.normal(k5, (N, 1), jnp.float32))
    mask_gt = (jax.random.uniform(k6, (N, 1)) > 0.5).astype(jnp.float32)

    loss_fn = Loss(full_weight=1.0, grad_weight=0.1, mask_weight=1.0,
                   binary_mask_gt=True)
    out_dict = {'rgb': rgb_pred, 'diff_norm': diff_norm, 'rgb_fine': rgb_fine}
    lt = loss_fn(out_dict, rgb_gt, mask=mask, mask_gt=mask_gt)
    jax.block_until_ready(lt['loss'])

    r = _ref_terms(rgb_pred, rgb_gt, diff_norm, mask, mask_gt, rgb_fine)
    ref_loss = 1.0 * r['rgb'] + 0.1 * r['grad'] + 1.0 * r['fine'] + 1.0 * r['bce']
    assert jnp.allclose(lt['rgb_loss'], r['rgb'], rtol=1e-4, atol=1e-4)
    assert jnp.allclose(lt['rgb_fine_loss'], r['fine'], rtol=1e-4, atol=1e-4)
    assert jnp.allclose(lt['grad_loss'], r['grad'], rtol=1e-4, atol=1e-4)
    assert jnp.allclose(lt['mask_loss'], r['bce'], rtol=1e-4, atol=1e-4)
    assert jnp.allclose(lt['loss'], ref_loss, rtol=1e-4, atol=1e-4)

    # ---- larger case (multi-block grid, 2-way parallel core axis, row mask,
    #      no rgb_fine, general two-log BCE path) ----
    N2 = 30000
    rgb_pred2 = jax.random.uniform(k7, (N2, C), jnp.float32)
    rgb_gt2 = jax.random.uniform(k8, (N2, C), jnp.float32)
    diff_norm2 = jnp.abs(jax.random.normal(k9, (N2, 1), jnp.float32))
    mask2 = jax.nn.sigmoid(jax.random.normal(k10, (N2, 1), jnp.float32))
    mask_gt2 = (jax.random.uniform(k11, (N2, 1)) > 0.5).astype(jnp.float32)

    loss_fn2 = Loss(full_weight=0.5, grad_weight=0.2, mask_weight=0.7,
                    binary_mask_gt=False)
    lt2 = loss_fn2({'rgb': rgb_pred2, 'diff_norm': diff_norm2},
                   rgb_gt2, mask=mask2, mask_gt=mask_gt2)
    jax.block_until_ready(lt2['loss'])

    r2 = _ref_terms(rgb_pred2, rgb_gt2, diff_norm2, mask2, mask_gt2)
    ref_loss2 = 0.5 * r2['rgb'] + 0.2 * r2['grad'] + 0.7 * r2['bce']
    assert jnp.allclose(lt2['rgb_loss'], r2['rgb'], rtol=1e-4, atol=1e-4)
    assert jnp.allclose(lt2['grad_loss'], r2['grad'], rtol=1e-4, atol=1e-4)
    assert jnp.allclose(lt2['mask_loss'], r2['bce'], rtol=1e-4, atol=1e-4)
    assert jnp.allclose(lt2['loss'], ref_loss2, rtol=1e-4, atol=1e-4)
    assert 'rgb_fine_loss' not in lt2

    print("KERNEL_OK")
</pallas_src>

<mosaic_0001>
module attributes {stable_mosaic.version = 11 : i64} {
  func.func @kernel(%arg0: i32, %arg1: i32, %arg2: memref<16x128xf32, #tpu.memory_space<vmem>>, %arg3: memref<16x128xf32, #tpu.memory_space<vmem>>, %arg4: memref<16x128xf32, #tpu.memory_space<vmem>>, %arg5: memref<16x128xf32, #tpu.memory_space<vmem>>, %arg6: memref<16x128xf32, #tpu.memory_space<vmem>>) attributes {dimension_semantics = [#tpu.dimension_semantics<parallel>, #tpu.dimension_semantics<arbitrary>], iteration_bounds = array<i64: 1, 1>, scalar_prefetch = 0 : i64, scratch_operands = 0 : i64, tpu.core_type = #tpu.core_type<tc>, window_params = [{transform_indices = @transform_0, window_bounds = array<i64: 16, 128>}, {transform_indices = @transform_1, window_bounds = array<i64: 16, 128>}, {transform_indices = @transform_2, window_bounds = array<i64: 16, 128>}, {transform_indices = @transform_3, window_bounds = array<i64: 16, 128>}, {transform_indices = @transform_4, window_bounds = array<i64: 16, 128>}]} {
    %c0_i32 = arith.constant 0 : i32
    %0 = arith.cmpi eq, %arg1, %c0_i32 : i32
    %1 = arith.extui %0 : i1 to i32
    %c0_i32_0 = arith.constant 0 : i32
    %2 = arith.cmpi ne, %1, %c0_i32_0 : i32
    scf.if %2 {
      %cst = arith.constant 0.000000e+00 : f32
      %16 = vector.broadcast %cst : f32 to vector<16x128xf32>
      %c0_14 = arith.constant 0 : index
      %c0_15 = arith.constant 0 : index
      %17 = vector.load %arg5[%c0_14, %c0_15] : memref<16x128xf32, #tpu.memory_space<vmem>>, vector<16x128xf32>
      tpu.vector_store %arg5[%c0_14, %c0_15], %16 {strides = array<i32>} : memref<16x128xf32, #tpu.memory_space<vmem>>, vector<16x128xf32>,
      %cst_16 = arith.constant 0.000000e+00 : f32
      %18 = vector.broadcast %cst_16 : f32 to vector<16x128xf32>
      %c0_17 = arith.constant 0 : index
      %c0_18 = arith.constant 0 : index
      %19 = vector.load %arg6[%c0_17, %c0_18] : memref<16x128xf32, #tpu.memory_space<vmem>>, vector<16x128xf32>
      tpu.vector_store %arg6[%c0_17, %c0_18], %18 {strides = array<i32>} : memref<16x128xf32, #tpu.memory_space<vmem>>, vector<16x128xf32>,
    } else {
    }
    %c0 = arith.constant 0 : index
    %c0_1 = arith.constant 0 : index
    %3 = vector.load %arg2[%c0, %c0_1] : memref<16x128xf32, #tpu.memory_space<vmem>>, vector<16x128xf32>
    %c0_2 = arith.constant 0 : index
    %c0_3 = arith.constant 0 : index
    %4 = vector.load %arg3[%c0_2, %c0_3] : memref<16x128xf32, #tpu.memory_space<vmem>>, vector<16x128xf32>
    %c0_4 = arith.constant 0 : index
    %c0_5 = arith.constant 0 : index
    %5 = vector.load %arg4[%c0_4, %c0_5] : memref<16x128xf32, #tpu.memory_space<vmem>>, vector<16x128xf32>
    %6 = arith.subf %3, %5 : vector<16x128xf32>
    %7 = math.absf %6 : vector<16x128xf32>
    %c0_6 = arith.constant 0 : index
    %c0_7 = arith.constant 0 : index
    %8 = vector.load %arg5[%c0_6, %c0_7] : memref<16x128xf32, #tpu.memory_space<vmem>>, vector<16x128xf32>
    %9 = arith.addf %8, %7 : vector<16x128xf32>
    %c0_8 = arith.constant 0 : index
    %c0_9 = arith.constant 0 : index
    %10 = vector.load %arg5[%c0_8, %c0_9] : memref<16x128xf32, #tpu.memory_space<vmem>>, vector<16x128xf32>
    tpu.vector_store %arg5[%c0_8, %c0_9], %9 {strides = array<i32>} : memref<16x128xf32, #tpu.memory_space<vmem>>, vector<16x128xf32>,
    %11 = arith.subf %4, %5 : vector<16x128xf32>
    %12 = math.absf %11 : vector<16x128xf32>
    %c0_10 = arith.constant 0 : index
    %c0_11 = arith.constant 0 : index
    %13 = vector.load %arg6[%c0_10, %c0_11] : memref<16x128xf32, #tpu.memory_space<vmem>>, vector<16x128xf32>
    %14 = arith.addf %13, %12 : vector<16x128xf32>
    %c0_12 = arith.constant 0 : index
    %c0_13 = arith.constant 0 : index
    %15 = vector.load %arg6[%c0_12, %c0_13] : memref<16x128xf32, #tpu.memory_space<vmem>>, vector<16x128xf32>
    tpu.vector_store %arg6[%c0_12, %c0_13], %14 {strides = array<i32>} : memref<16x128xf32, #tpu.memory_space<vmem>>, vector<16x128xf32>,
    return
  }
  func.func @transform_0(%arg0: i32, %arg1: i32) -> (i32, i32) {
    %c1_i32 = arith.constant 1 : i32
    %0 = arith.muli %arg0, %c1_i32 : i32
    %1 = arith.addi %0, %arg1 : i32
    %c0_i32 = arith.constant 0 : i32
    %c0_i32_0 = arith.constant 0 : i32
    return %1, %c0_i32 : i32, i32
  }
  func.func @transform_1(%arg0: i32, %arg1: i32) -> (i32, i32) {
    %c1_i32 = arith.constant 1 : i32
    %0 = arith.muli %arg0, %c1_i32 : i32
    %1 = arith.addi %0, %arg1 : i32
    %c0_i32 = arith.constant 0 : i32
    %c0_i32_0 = arith.constant 0 : i32
    return %1, %c0_i32 : i32, i32
  }
  func.func @transform_2(%arg0: i32, %arg1: i32) -> (i32, i32) {
    %c1_i32 = arith.constant 1 : i32
    %0 = arith.muli %arg0, %c1_i32 : i32
    %1 = arith.addi %0, %arg1 : i32
    %c0_i32 = arith.constant 0 : i32
    %c0_i32_0 = arith.constant 0 : i32
    return %1, %c0_i32 : i32, i32
  }
  func.func @transform_3(%arg0: i32, %arg1: i32) -> (i32, i32) {
    %c0_i32 = arith.constant 0 : i32
    %c0_i32_0 = arith.constant 0 : i32
    return %arg0, %c0_i32 : i32, i32
  }
  func.func @transform_4(%arg0: i32, %arg1: i32) -> (i32, i32) {
    %c0_i32 = arith.constant 0 : i32
    %c0_i32_0 = arith.constant 0 : i32
    return %arg0, %c0_i32 : i32, i32
  }
}

</mosaic_0001>

<llo_original>
// kernel: tpu_custom_call.1
$region0: #{tpu_custom_call.1}
  #allocation0 [shape = 'u32[]', space=smem, size = 0x4, offset = 0x4, fixed_abs, tag = 'smem constant byte address 0x4 - core index']
  #allocation1 [shape = 'u32[144,128]{1,0:T(1,128)}', space=vmem, size = 0x12000, scoped, tag = 'internal scratch']
  %s0 = inlined_call_operand.hbm [shape: f32[16,128], index: 0, kind: input, shape index: {}]
  %s1 = inlined_call_operand.hbm [shape: f32[16,128], index: 1, kind: input, shape index: {}]
  %s2 = inlined_call_operand.hbm [shape: f32[16,128], index: 2, kind: input, shape index: {}]
  %s3 = inlined_call_operand.hbm [shape: f32[16,128], index: 3, kind: output, shape index: {0}]
  %s4 = inlined_call_operand.hbm [shape: f32[16,128], index: 4, kind: output, shape index: {1}]
  %5 = xla_tuple %s3, %s4
  %s6 = sld [smem:[#allocation0]]
  $region46: #{tpu_custom_call.1} parent=0
    _
  %s8 = ssub.s32 1, %s6
  %s9 = scalar_select 0, %s8, %s6
  $region1: #{tpu_custom_call.1} parent=0
    #allocation2 [shape = 'u8[8192]{0}', space=vmem, size = 0x2000, scoped, tag = 'input window, operand 0, single buffered']
    #allocation3 [shape = 's32[1]{0}', space=sflag, size = 0x4, scoped, tag = 'scoped memory for tpu_custom_call.1']
    #allocation4 [shape = 's32[1]{0}', space=sflag, size = 0x4, scoped, tag = 'scoped memory for tpu_custom_call.1']
    #allocation5 [shape = 'u8[8192]{0}', space=vmem, size = 0x2000, scoped, tag = 'input window, operand 1, single buffered']
    #allocation6 [shape = 's32[1]{0}', space=sflag, size = 0x4, scoped, tag = 'scoped memory for tpu_custom_call.1']
    #allocation7 [shape = 'u8[8192]{0}', space=vmem, size = 0x2000, scoped, tag = 'input window, operand 2, single buffered']
    #allocation8 [shape = 'u8[8192]{0}', space=vmem, size = 0x2000, scoped, tag = 'output window, operand 0, single buffered']
    #allocation9 [shape = 'u8[8192]{0}', space=vmem, size = 0x2000, scoped, tag = 'output window, operand 1, single buffered']
    #allocation10 [shape = 's32[1]{0}', space=sflag, size = 0x4, scoped, tag = 'scoped memory for tpu_custom_call.1']
    %10 = vsyncpa [#allocation3], 0
    %11 = vsyncpa [#allocation6], 0
    %12 = vsyncpa [#allocation4], 0
    %13 = vsyncpa [#allocation10], 0
    // Predicated region
    $region2: #{tpu_custom_call.1} parent=1 // pred_check
      _
    $region3: #{tpu_custom_call.1} parent=1 // pred_check_branch
      %15 = sbr.rel (0) target = $region5
    $region4: #{tpu_custom_call.1} parent=1 // pred_region
      %s16 = sadd.s32 0, 0
      %s17 = smul.u32 2, %s16
      %s19 = ssub.s32 256, 256
      %20 = vsyncadd [#allocation3], %s19
      %s21 = smul.addr %s17, 128
      %s22 = scalar_lea.hbm %s0, %s21
      %s23 = sshll.u32 [#allocation2], 4
      %s24 = int_to_ptr.vmem [resolvable:$true] %s23
      %29 = dma.hbm_to_vmem [thread:$0]  %s22, 256, %s24, [#allocation3], 128, 128, 8
    $region5: #{tpu_custom_call.1} parent=1 // pred_fallthru
      _
    // Predicated region
    $region6: #{tpu_custom_call.1} parent=1 // pred_check
      _
    $region7: #{tpu_custom_call.1} parent=1 // pred_check_branch
      %31 = sbr.rel (0) target = $region9
    $region8: #{tpu_custom_call.1} parent=1 // pred_region
      %s32 = sadd.s32 0, 0
      %s33 = smul.u32 2, %s32
      %s35 = ssub.s32 256, 256
      %36 = vsyncadd [#allocation6], %s35
      %s37 = smul.addr %s33, 128
      %s38 = scalar_lea.hbm %s1, %s37
      %s39 = sshll.u32 [#allocation5], 4
      %s40 = int_to_ptr.vmem [resolvable:$true] %s39
      %45 = dma.hbm_to_vmem [thread:$0]  %s38, 256, %s40, [#allocation6], 128, 128, 8
    $region9: #{tpu_custom_call.1} parent=1 // pred_fallthru
      _
    // Predicated region
    $region10: #{tpu_custom_call.1} parent=1 // pred_check
      _
    $region11: #{tpu_custom_call.1} parent=1 // pred_check_branch
      %47 = sbr.rel (0) target = $region13
    $region12: #{tpu_custom_call.1} parent=1 // pred_region
      %s48 = sadd.s32 0, 0
      %s49 = smul.u32 2, %s48
      %s51 = ssub.s32 256, 256
      %52 = vsyncadd [#allocation6], %s51
      %s53 = smul.addr %s49, 128
      %s54 = scalar_lea.hbm %s2, %s53
      %s55 = sshll.u32 [#allocation7], 4
      %s56 = int_to_ptr.vmem [resolvable:$true] %s55
      %61 = dma.hbm_to_vmem [thread:$0]  %s54, 256, %s56, [#allocation6], 128, 128, 8
    $region13: #{tpu_custom_call.1} parent=1 // pred_fallthru
      _
    // Predicated region
    $region14: #{tpu_custom_call.1} parent=1 // pred_check
      _
    $region15: #{tpu_custom_call.1} parent=1 // pred_check_branch
      %63 = sbr.rel (0) target = $region17
    $region16: #{tpu_custom_call.1} parent=1 // pred_region
      %64 = dma.done [#allocation3], 256
    $region17: #{tpu_custom_call.1} parent=1 // pred_fallthru
      _
    // Predicated region
    $region18: #{tpu_custom_call.1} parent=1 // pred_check
      _
    $region19: #{tpu_custom_call.1} parent=1 // pred_check_branch
      %66 = sbr.rel (0) target = $region21
    $region20: #{tpu_custom_call.1} parent=1 // pred_region
      %67 = dma.done [#allocation6], 256
    $region21: #{tpu_custom_call.1} parent=1 // pred_fallthru
      _
    // Predicated region
    $region22: #{tpu_custom_call.1} parent=1 // pred_check
      _
    $region23: #{tpu_custom_call.1} parent=1 // pred_check_branch
      %69 = sbr.rel (0) target = $region25
    $region24: #{tpu_custom_call.1} parent=1 // pred_region
      %70 = dma.done [#allocation6], 256
    $region25: #{tpu_custom_call.1} parent=1 // pred_fallthru
      _
    %s71 = sadd.s32 0, 0
    %s72 = smul.u32 2, %s71
    %s73 = sadd.s32 0, 0
    %s74 = smul.u32 2, %s73
    %s75 = sadd.s32 0, 0
    %s76 = smul.u32 2, %s75
    %p77 = scmp.eq.s32.totalorder 0, 0
    // Predicated region
    $region26: #{tpu_custom_call.1} parent=1 // pred_check
      %p78 = pneg %p77
    $region27: #{tpu_custom_call.1} parent=1 // pred_check_branch
      %80 = sbr.rel (%p78) target = $region29
    $region28: #{tpu_custom_call.1} parent=1 // pred_region
      %81 = vst [vmem:[#allocation8] sm:$0xff] 0.0
      %82 = vst [vmem:[#allocation8 + $0x8] sm:$0xff] 0.0
      %83 = vst [vmem:[#allocation9] sm:$0xff] 0.0
      %84 = vst [vmem:[#allocation9 + $0x8] sm:$0xff] 0.0
    $region29: #{tpu_custom_call.1} parent=1 // pred_fallthru
      _
    %v85 = vld [vmem:[#allocation2] sm:$0xff]
    %v86 = vld [vmem:[#allocation2 + $0x8] sm:$0xff]
    %v87 = vld [vmem:[#allocation5] sm:$0xff]
    %v88 = vld [vmem:[#allocation5 + $0x8] sm:$0xff]
    %v89 = vld [vmem:[#allocation7] sm:$0xff]
    %v90 = vld [vmem:[#allocation7 + $0x8] sm:$0xff]
    %v91 = vsub.f32 %v85, %v89
    %v92 = vsub.f32 %v86, %v90
    %v93 = vand.u32 2147483647, %v91
    %v94 = vand.u32 2147483647, %v92
    %v95 = vld [vmem:[#allocation8] sm:$0xff]
    %v96 = vld [vmem:[#allocation8 + $0x8] sm:$0xff]
    %v97 = vadd.f32 %v95, %v93
    %v98 = vadd.f32 %v96, %v94
    %99 = vst [vmem:[#allocation8] sm:$0xff] %v97
    %100 = vst [vmem:[#allocation8 + $0x8] sm:$0xff] %v98
    %v101 = vsub.f32 %v87, %v89
    %v102 = vsub.f32 %v88, %v90
    %v103 = vand.u32 2147483647, %v101
    %v104 = vand.u32 2147483647, %v102
    %v105 = vld [vmem:[#allocation9] sm:$0xff]
    %v106 = vld [vmem:[#allocation9 + $0x8] sm:$0xff]
    %v107 = vadd.f32 %v105, %v103
    %v108 = vadd.f32 %v106, %v104
    %109 = vst [vmem:[#allocation9] sm:$0xff] %v107
    %110 = vst [vmem:[#allocation9 + $0x8] sm:$0xff] %v108
    // Predicated region
    $region30: #{tpu_custom_call.1} parent=1 // pred_check
      _
    $region31: #{tpu_custom_call.1} parent=1 // pred_check_branch
      %112 = sbr.rel (0) target = $region33
    $region32: #{tpu_custom_call.1} parent=1 // pred_region
      %s114 = ssub.s32 256, 256
      %115 = vsyncadd [#allocation4], %s114
      %s116 = sshll.u32 [#allocation8], 4
      %s117 = int_to_ptr.vmem [resolvable:$true] %s116
      %122 = dma.vmem_to_hbm [thread:$0]  %s117, 256, %s3, [#allocation4], 128, 128, 8
    $region33: #{tpu_custom_call.1} parent=1 // pred_fallthru
      _
    // Predicated region
    $region34: #{tpu_custom_call.1} parent=1 // pred_check
      _
    $region35: #{tpu_custom_call.1} parent=1 // pred_check_branch
      %124 = sbr.rel (0) target = $region37
    $region36: #{tpu_custom_call.1} parent=1 // pred_region
      %s126 = ssub.s32 256, 256
      %127 = vsyncadd [#allocation10], %s126
      %s128 = sshll.u32 [#allocation9], 4
      %s129 = int_to_ptr.vmem [resolvable:$true] %s128
      %134 = dma.vmem_to_hbm [thread:$0]  %s129, 256, %s4, [#allocation10], 128, 128, 8
    $region37: #{tpu_custom_call.1} parent=1 // pred_fallthru
      _
    // Predicated region
    $region38: #{tpu_custom_call.1} parent=1 // pred_check
      _
    $region39: #{tpu_custom_call.1} parent=1 // pred_check_branch
      %136 = sbr.rel (0) target = $region41
    $region40: #{tpu_custom_call.1} parent=1 // pred_region
      %137 = dma.done [#allocation4], 256
    $region41: #{tpu_custom_call.1} parent=1 // pred_fallthru
      _
    // Predicated region
    $region42: #{tpu_custom_call.1} parent=1 // pred_check
      _
    $region43: #{tpu_custom_call.1} parent=1 // pred_check_branch
      %139 = sbr.rel (0) target = $region45
    $region44: #{tpu_custom_call.1} parent=1 // pred_region
      %140 = dma.done [#allocation10], 256
    $region45: #{tpu_custom_call.1} parent=1 // pred_fallthru
      _
    %141 = vsyncpa [#allocation3], 1
    %142 = vsyncpa [#allocation6], 1
    %143 = vsyncpa [#allocation4], 1
    %144 = vsyncpa [#allocation10], 1

</llo_original>
